<compile_context>
chip_gen: v7x
topology: tpu7x:2x2x1
jax: 0.10.0
libtpu: 0.0.40
codegen_flags: <defaults>
</compile_context>

<pallas_src>
import functools

import jax
import jax.numpy as jnp
from jax.experimental import pallas as pl
from jax.experimental.pallas import tpu as pltpu

HIDDEN_SIZE = 256
INPUT_SIZE = 1
OUTPUT_SIZE = 1
TIME_STEP = 5


def _rnn_kernel(time_step, xin_ref, whh_ref, wout_ref, bout_ref, out_ref):
  """Sequential tanh-RNN over `time_step` steps + linear head on final hidden.

  xin_ref : (T, B, H) f32   precomputed x_t * w_ih_row + (b_ih + b_hh)
  whh_ref : (H, H)   bf16   W_hh^T (right-multiply layout)
  wout_ref: (1, H)   f32    output-head weights as a row
  bout_ref: (1, O)   f32    output-head bias
  out_ref : (B, O)   f32
  """
  # h_0 = 0  ->  the W_hh contribution of step 0 vanishes.
  h = jnp.tanh(xin_ref[0])                                     # (B, H) f32

  # time_step is a small static constant (5): unrolled Python loop.
  for t in range(1, time_step):
    rec = jnp.dot(h.astype(jnp.bfloat16), whh_ref[...],
                  preferred_element_type=jnp.float32)          # (B, H) f32
    h = jnp.tanh(xin_ref[t] + rec)

  # O == 1: VPU multiply + row reduce instead of an N=1 MXU matmul.
  out_ref[...] = (jnp.sum(h * wout_ref[...], axis=-1, keepdims=True)
                  + bout_ref[...])                             # (B, O)


def prepare_params(params):
  """One-time weight prep (transpose / fuse / cast) so the per-call path is minimal."""
  w_ih, w_hh, b_ih, b_hh, w_out, b_out = params
  H = w_hh.shape[0]
  O = w_out.shape[0]
  w_ih_row = jnp.reshape(w_ih.astype(jnp.float32), (1, 1, H))        # (1,1,H)
  whh_t_bf16 = jnp.transpose(w_hh).astype(jnp.bfloat16)              # (H,H) bf16
  b_fused = jnp.reshape((b_ih + b_hh).astype(jnp.float32), (1, 1, H))
  wout_row = jnp.reshape(w_out.astype(jnp.float32), (1, H))          # (1,H)
  bout = jnp.reshape(b_out.astype(jnp.float32), (1, O))              # (1,O)
  return (w_ih_row, whh_t_bf16, b_fused, wout_row, bout)


@functools.partial(jax.jit, static_argnames=("time_step",))
def myrnn_forward(x, prepared, *, time_step=TIME_STEP):
  """x: (B, T, 1) float32.  Returns (B, 1) float32 (== PyTorch out[:, -1, :])."""
  w_ih_row, whh_t_bf16, b_fused, wout_row, bout = prepared
  B, T, I = x.shape
  assert T == time_step and I == INPUT_SIZE
  O = bout.shape[1]

  # Precompute the full input projection + fused bias outside the recurrence:
  # xin[t, b, :] = x[b, t, 0] * w_ih_row + (b_ih + b_hh)     -> (T, B, H)
  x_tb = jnp.transpose(x[..., 0].astype(jnp.float32))        # (T, B)
  xin = x_tb[:, :, None] * w_ih_row + b_fused                # (T, B, H) f32

  vmem = pl.BlockSpec(memory_space=pltpu.MemorySpace.VMEM)
  kernel = functools.partial(_rnn_kernel, time_step)

  # Single VMEM-resident block, no grid: total operand footprint is ~170 KiB,
  # far below every generation's scoped-VMEM default.
  return pl.pallas_call(
      kernel,
      out_shape=jax.ShapeDtypeStruct((B, O), jnp.float32),
      in_specs=[vmem] * 4,
      out_specs=vmem,
  )(xin, whh_t_bf16, wout_row, bout)


def init_params(key, input_size=INPUT_SIZE, hidden_size=HIDDEN_SIZE,
                output_size=OUTPUT_SIZE):
  """Deterministic init mimicking PyTorch's U(-1/sqrt(H), 1/sqrt(H)) ranges."""
  k = jax.random.split(key, 6)
  s = 1.0 / jnp.sqrt(hidden_size)
  w_ih = jax.random.uniform(k[0], (hidden_size, input_size), jnp.float32, -s, s)
  w_hh = jax.random.uniform(k[1], (hidden_size, hidden_size), jnp.float32, -s, s)
  b_ih = jax.random.uniform(k[2], (hidden_size,), jnp.float32, -s, s)
  b_hh = jax.random.uniform(k[3], (hidden_size,), jnp.float32, -s, s)
  w_out = jax.random.uniform(k[4], (output_size, hidden_size), jnp.float32, -s, s)
  b_out = jax.random.uniform(k[5], (output_size,), jnp.float32, -s, s)
  return (w_ih, w_hh, b_ih, b_hh, w_out, b_out)


def myrnn_reference(x, params, *, time_step=TIME_STEP):
  """Pure-JAX f32 reference of the PyTorch forward (for validation)."""
  w_ih, w_hh, b_ih, b_hh, w_out, b_out = params
  B = x.shape[0]
  H = w_hh.shape[0]
  h = jnp.zeros((B, H), jnp.float32)
  for t in range(time_step):
    x_t = x[:, t, :]                                  # (B, I)
    h = jnp.tanh(x_t @ w_ih.T + b_ih + h @ w_hh.T + b_hh)
  out = h @ w_out.T + b_out                           # (B, O)  == out[:, -1, :]
  return out


if __name__ == "__main__":
  key = jax.random.PRNGKey(0)
  kx, kp = jax.random.split(key)

  B = 8
  x = jax.random.normal(kx, (B, TIME_STEP, INPUT_SIZE), jnp.float32)
  params = init_params(kp)
  prepared = prepare_params(params)        # one-time weight transpose / fuse

  out = myrnn_forward(x, prepared, time_step=TIME_STEP)
  out = jax.block_until_ready(out)

  ref = myrnn_reference(x, params, time_step=TIME_STEP)
  assert out.shape == (B, OUTPUT_SIZE)
  # bf16 recurrent matmul (f32 accumulation) drifts slightly from the f32
  # reference -> relaxed tolerance.
  assert jnp.allclose(out, ref, atol=1e-2, rtol=1e-2), "mismatch vs reference"

  print("KERNEL_OK")
</pallas_src>

<mosaic_0001>
module attributes {stable_mosaic.version = 11 : i64} {
  func.func @_rnn_kernel(%arg0: memref<5x8x256xf32, #tpu.memory_space<vmem>>, %arg1: memref<256x256xbf16, #tpu.memory_space<vmem>>, %arg2: memref<1x256xf32, #tpu.memory_space<vmem>>, %arg3: memref<1x1xf32, #tpu.memory_space<vmem>>, %arg4: memref<8x1xf32, #tpu.memory_space<vmem>>) attributes {dimension_semantics = [], scalar_prefetch = 0 : i64, scratch_operands = 0 : i64, tpu.core_type = #tpu.core_type<tc>} {
    %c0 = arith.constant 0 : index
    %c0_0 = arith.constant 0 : index
    %c0_1 = arith.constant 0 : index
    %0 = vector.load %arg0[%c0, %c0_0, %c0_1] : memref<5x8x256xf32, #tpu.memory_space<vmem>>, vector<1x8x256xf32>
    %1 = vector.shape_cast %0 : vector<1x8x256xf32> to vector<8x256xf32>
    %2 = math.tanh %1 : vector<8x256xf32>
    %3 = arith.truncf %2 : vector<8x256xf32> to vector<8x256xbf16>
    %c0_2 = arith.constant 0 : index
    %c0_3 = arith.constant 0 : index
    %4 = vector.load %arg1[%c0_2, %c0_3] : memref<256x256xbf16, #tpu.memory_space<vmem>>, vector<256x256xbf16>
    %cst = arith.constant dense<0.000000e+00> : vector<8x256xf32>
    %5 = tpu.matmul %3, %4, %cst {dimension_numbers = #tpu.dot_dimension_numbers<[1], [0], [0], [1], [0, 0, 1, 1], [], []>} : vector<8x256xbf16>, vector<256x256xbf16>, vector<8x256xf32> -> vector<8x256xf32>
    %c1 = arith.constant 1 : index
    %c0_4 = arith.constant 0 : index
    %c0_5 = arith.constant 0 : index
    %6 = vector.load %arg0[%c1, %c0_4, %c0_5] : memref<5x8x256xf32, #tpu.memory_space<vmem>>, vector<1x8x256xf32>
    %7 = vector.shape_cast %6 : vector<1x8x256xf32> to vector<8x256xf32>
    %8 = arith.addf %7, %5 : vector<8x256xf32>
    %9 = math.tanh %8 : vector<8x256xf32>
    %10 = arith.truncf %9 : vector<8x256xf32> to vector<8x256xbf16>
    %c0_6 = arith.constant 0 : index
    %c0_7 = arith.constant 0 : index
    %11 = vector.load %arg1[%c0_6, %c0_7] : memref<256x256xbf16, #tpu.memory_space<vmem>>, vector<256x256xbf16>
    %cst_8 = arith.constant dense<0.000000e+00> : vector<8x256xf32>
    %12 = tpu.matmul %10, %11, %cst_8 {dimension_numbers = #tpu.dot_dimension_numbers<[1], [0], [0], [1], [0, 0, 1, 1], [], []>} : vector<8x256xbf16>, vector<256x256xbf16>, vector<8x256xf32> -> vector<8x256xf32>
    %c2 = arith.constant 2 : index
    %c0_9 = arith.constant 0 : index
    %c0_10 = arith.constant 0 : index
    %13 = vector.load %arg0[%c2, %c0_9, %c0_10] : memref<5x8x256xf32, #tpu.memory_space<vmem>>, vector<1x8x256xf32>
    %14 = vector.shape_cast %13 : vector<1x8x256xf32> to vector<8x256xf32>
    %15 = arith.addf %14, %12 : vector<8x256xf32>
    %16 = math.tanh %15 : vector<8x256xf32>
    %17 = arith.truncf %16 : vector<8x256xf32> to vector<8x256xbf16>
    %c0_11 = arith.constant 0 : index
    %c0_12 = arith.constant 0 : index
    %18 = vector.load %arg1[%c0_11, %c0_12] : memref<256x256xbf16, #tpu.memory_space<vmem>>, vector<256x256xbf16>
    %cst_13 = arith.constant dense<0.000000e+00> : vector<8x256xf32>
    %19 = tpu.matmul %17, %18, %cst_13 {dimension_numbers = #tpu.dot_dimension_numbers<[1], [0], [0], [1], [0, 0, 1, 1], [], []>} : vector<8x256xbf16>, vector<256x256xbf16>, vector<8x256xf32> -> vector<8x256xf32>
    %c3 = arith.constant 3 : index
    %c0_14 = arith.constant 0 : index
    %c0_15 = arith.constant 0 : index
    %20 = vector.load %arg0[%c3, %c0_14, %c0_15] : memref<5x8x256xf32, #tpu.memory_space<vmem>>, vector<1x8x256xf32>
    %21 = vector.shape_cast %20 : vector<1x8x256xf32> to vector<8x256xf32>
    %22 = arith.addf %21, %19 : vector<8x256xf32>
    %23 = math.tanh %22 : vector<8x256xf32>
    %24 = arith.truncf %23 : vector<8x256xf32> to vector<8x256xbf16>
    %c0_16 = arith.constant 0 : index
    %c0_17 = arith.constant 0 : index
    %25 = vector.load %arg1[%c0_16, %c0_17] : memref<256x256xbf16, #tpu.memory_space<vmem>>, vector<256x256xbf16>
    %cst_18 = arith.constant dense<0.000000e+00> : vector<8x256xf32>
    %26 = tpu.matmul %24, %25, %cst_18 {dimension_numbers = #tpu.dot_dimension_numbers<[1], [0], [0], [1], [0, 0, 1, 1], [], []>} : vector<8x256xbf16>, vector<256x256xbf16>, vector<8x256xf32> -> vector<8x256xf32>
    %c4 = arith.constant 4 : index
    %c0_19 = arith.constant 0 : index
    %c0_20 = arith.constant 0 : index
    %27 = vector.load %arg0[%c4, %c0_19, %c0_20] : memref<5x8x256xf32, #tpu.memory_space<vmem>>, vector<1x8x256xf32>
    %28 = vector.shape_cast %27 : vector<1x8x256xf32> to vector<8x256xf32>
    %29 = arith.addf %28, %26 : vector<8x256xf32>
    %30 = math.tanh %29 : vector<8x256xf32>
    %c0_21 = arith.constant 0 : index
    %c0_22 = arith.constant 0 : index
    %31 = vector.load %arg2[%c0_21, %c0_22] : memref<1x256xf32, #tpu.memory_space<vmem>>, vector<1x256xf32>
    %32 = vector.broadcast %31 : vector<1x256xf32> to vector<8x256xf32>
    %33 = arith.mulf %30, %32 : vector<8x256xf32>
    %cst_23 = arith.constant dense<0.000000e+00> : vector<8xf32>
    %34 = vector.multi_reduction <add>, %33, %cst_23 [1] : vector<8x256xf32> to vector<8xf32>
    %35 = vector.shape_cast %34 : vector<8xf32> to vector<8x1xf32>
    %c0_24 = arith.constant 0 : index
    %c0_25 = arith.constant 0 : index
    %36 = vector.load %arg3[%c0_24, %c0_25] : memref<1x1xf32, #tpu.memory_space<vmem>>, vector<1x1xf32>
    %37 = vector.broadcast %36 : vector<1x1xf32> to vector<8x1xf32>
    %38 = arith.addf %35, %37 : vector<8x1xf32>
    %c0_26 = arith.constant 0 : index
    %c0_27 = arith.constant 0 : index
    %39 = vector.load %arg4[%c0_26, %c0_27] : memref<8x1xf32, #tpu.memory_space<vmem>>, vector<8x1xf32>
    tpu.vector_store %arg4[%c0_26, %c0_27], %38 {strides = array<i32>} : memref<8x1xf32, #tpu.memory_space<vmem>>, vector<8x1xf32>,
    return
  }
}

</mosaic_0001>

<llo_original>
// kernel: myrnn_forward.1
$region0: #{myrnn_forward.1}
  #allocation0 [shape = 'u32[]', space=smem, size = 0x4, offset = 0x4, fixed_abs, tag = 'smem constant byte address 0x4 - core index']
  #allocation1 [shape = 'u32[144,128]{1,0:T(1,128)}', space=vmem, size = 0x12000, scoped, tag = 'internal scratch']
  #allocation2 [shape = 'f32[1,1]{1,0:T(1,128)S(1)}', space=vmem, size = 0x200, scoped, tag = 'scoped memory for myrnn_forward.1']
  %s0 = inlined_call_operand.vmem [shape: f32[5,8,256], index: 0, kind: input, shape index: {}]
  %s1 = inlined_call_operand.hbm [shape: bf16[256,256], index: 1, kind: input, shape index: {}]
  %s2 = inlined_call_operand.vmem [shape: f32[1,256], index: 2, kind: input, shape index: {}]
  %s3 = inlined_call_operand.<no memory space> [shape: f32[1,1], index: 3, kind: input, shape index: {}]
  %s4 = inlined_call_operand.vmem [shape: f32[8,1], index: 4, kind: output, shape index: {}]
  %s5 = sld [smem:[#allocation0]]
  $region30: #{myrnn_forward.1} parent=0
    _
  %s7 = ssub.s32 1, %s5
  %s8 = scalar_select 0, %s7, %s5
  %v9 = vstv %s3
  %10 = vst [vmem:[#allocation2] sm:$0x1] %v9
  $region1: #{myrnn_forward.1} parent=0
    #allocation3 [shape = 'u8[131072]{0}', space=vmem, size = 0x20000, scoped, tag = 'input window, operand 1, single buffered']
    #allocation4 [shape = 's32[1]{0}', space=sflag, size = 0x4, scoped, tag = 'scoped memory for myrnn_forward.1']
    %11 = vsyncpa [#allocation4], 0
    // Predicated region
    $region2: #{myrnn_forward.1} parent=1 // pred_check
      _
    $region3: #{myrnn_forward.1} parent=1 // pred_check_branch
      %13 = sbr.rel (0) target = $region5
    $region4: #{myrnn_forward.1} parent=1 // pred_region
      _
    $region5: #{myrnn_forward.1} parent=1 // pred_fallthru
      _
    // Predicated region
    $region6: #{myrnn_forward.1} parent=1 // pred_check
      _
    $region7: #{myrnn_forward.1} parent=1 // pred_check_branch
      %15 = sbr.rel (0) target = $region9
    $region8: #{myrnn_forward.1} parent=1 // pred_region
      %s17 = ssub.s32 4096, 4096
      %18 = vsyncadd [#allocation4], %s17
      %s19 = sshll.u32 [#allocation3], 4
      %s20 = int_to_ptr.vmem [resolvable:$true] %s19
      %25 = dma.hbm_to_vmem [thread:$0]  %s1, 4096, %s20, [#allocation4], 128, 128, 8
    $region9: #{myrnn_forward.1} parent=1 // pred_fallthru
      _
    // Predicated region
    $region10: #{myrnn_forward.1} parent=1 // pred_check
      _
    $region11: #{myrnn_forward.1} parent=1 // pred_check_branch
      %27 = sbr.rel (0) target = $region13
    $region12: #{myrnn_forward.1} parent=1 // pred_region
      _
    $region13: #{myrnn_forward.1} parent=1 // pred_fallthru
      _
    // Predicated region
    $region14: #{myrnn_forward.1} parent=1 // pred_check
      _
    $region15: #{myrnn_forward.1} parent=1 // pred_check_branch
      %29 = sbr.rel (0) target = $region17
    $region16: #{myrnn_forward.1} parent=1 // pred_region
      _
    $region17: #{myrnn_forward.1} parent=1 // pred_fallthru
      _
    // Predicated region
    $region18: #{myrnn_forward.1} parent=1 // pred_check
      _
    $region19: #{myrnn_forward.1} parent=1 // pred_check_branch
      %31 = sbr.rel (0) target = $region21
    $region20: #{myrnn_forward.1} parent=1 // pred_region
      %32 = dma.done [#allocation4], 4096
    $region21: #{myrnn_forward.1} parent=1 // pred_fallthru
      _
    %v33 = vld [vmem:[%s0] sm:$0xff]
    %v34 = vld [vmem:[%s0 + $0x8] sm:$0xff]
    %v35 = vtanh.pop %v33
    %v36 = vtanh.pop %v34
    %v37 = vpack.c.bf16 %v35, %v35
    %v38 = vpack.c.bf16 %v36, %v36
    %v39 = vld [vmem:[#allocation3] sm:$0xff]
    %v40 = vld [vmem:[#allocation3 + $0x8] sm:$0xff]
    %v41 = vld [vmem:[#allocation3 + $0x10] sm:$0xff]
    %v42 = vld [vmem:[#allocation3 + $0x18] sm:$0xff]
    %v43 = vld [vmem:[#allocation3 + $0x20] sm:$0xff]
    %v44 = vld [vmem:[#allocation3 + $0x28] sm:$0xff]
    %v45 = vld [vmem:[#allocation3 + $0x30] sm:$0xff]
    %v46 = vld [vmem:[#allocation3 + $0x38] sm:$0xff]
    %v47 = vld [vmem:[#allocation3 + $0x40] sm:$0xff]
    %v48 = vld [vmem:[#allocation3 + $0x48] sm:$0xff]
    %v49 = vld [vmem:[#allocation3 + $0x50] sm:$0xff]
    %v50 = vld [vmem:[#allocation3 + $0x58] sm:$0xff]
    %v51 = vld [vmem:[#allocation3 + $0x60] sm:$0xff]
    %v52 = vld [vmem:[#allocation3 + $0x68] sm:$0xff]
    %v53 = vld [vmem:[#allocation3 + $0x70] sm:$0xff]
    %v54 = vld [vmem:[#allocation3 + $0x78] sm:$0xff]
    %v55 = vld [vmem:[#allocation3 + $0x80] sm:$0xff]
    %v56 = vld [vmem:[#allocation3 + $0x88] sm:$0xff]
    %v57 = vld [vmem:[#allocation3 + $0x90] sm:$0xff]
    %v58 = vld [vmem:[#allocation3 + $0x98] sm:$0xff]
    %v59 = vld [vmem:[#allocation3 + $0xa0] sm:$0xff]
    %v60 = vld [vmem:[#allocation3 + $0xa8] sm:$0xff]
    %v61 = vld [vmem:[#allocation3 + $0xb0] sm:$0xff]
    %v62 = vld [vmem:[#allocation3 + $0xb8] sm:$0xff]
    %v63 = vld [vmem:[#allocation3 + $0xc0] sm:$0xff]
    %v64 = vld [vmem:[#allocation3 + $0xc8] sm:$0xff]
    %v65 = vld [vmem:[#allocation3 + $0xd0] sm:$0xff]
    %v66 = vld [vmem:[#allocation3 + $0xd8] sm:$0xff]
    %v67 = vld [vmem:[#allocation3 + $0xe0] sm:$0xff]
    %v68 = vld [vmem:[#allocation3 + $0xe8] sm:$0xff]
    %v69 = vld [vmem:[#allocation3 + $0xf0] sm:$0xff]
    %v70 = vld [vmem:[#allocation3 + $0xf8] sm:$0xff]
    %v103 = vunpack.c.l.b16 %v39
    %v104 = vunpack.c.h.b16 %v39
    %v105 = vunpack.c.l.b16 %v40
    %v106 = vunpack.c.h.b16 %v40
    %v107 = vunpack.c.l.b16 %v41
    %v108 = vunpack.c.h.b16 %v41
    %v109 = vunpack.c.l.b16 %v42
    %v110 = vunpack.c.h.b16 %v42
    %v111 = vunpack.c.l.b16 %v43
    %v112 = vunpack.c.h.b16 %v43
    %v113 = vunpack.c.l.b16 %v44
    %v114 = vunpack.c.h.b16 %v44
    %v115 = vunpack.c.l.b16 %v45
    %v116 = vunpack.c.h.b16 %v45
    %v117 = vunpack.c.l.b16 %v46
    %v118 = vunpack.c.h.b16 %v46
    %v119 = vunpack.c.l.b16 %v47
    %v120 = vunpack.c.h.b16 %v47
    %v121 = vunpack.c.l.b16 %v48
    %v122 = vunpack.c.h.b16 %v48
    %v123 = vunpack.c.l.b16 %v49
    %v124 = vunpack.c.h.b16 %v49
    %v125 = vunpack.c.l.b16 %v50
    %v126 = vunpack.c.h.b16 %v50
    %v127 = vunpack.c.l.b16 %v51
    %v128 = vunpack.c.h.b16 %v51
    %v129 = vunpack.c.l.b16 %v52
    %v130 = vunpack.c.h.b16 %v52
    %v131 = vunpack.c.l.b16 %v53
    %v132 = vunpack.c.h.b16 %v53
    %v133 = vunpack.c.l.b16 %v54
    %v134 = vunpack.c.h.b16 %v54
    %v135 = vunpack.c.l.b16 %v55
    %v136 = vunpack.c.h.b16 %v55
    %v137 = vunpack.c.l.b16 %v56
    %v138 = vunpack.c.h.b16 %v56
    %v139 = vunpack.c.l.b16 %v57
    %v140 = vunpack.c.h.b16 %v57
    %v141 = vunpack.c.l.b16 %v58
    %v142 = vunpack.c.h.b16 %v58
    %v143 = vunpack.c.l.b16 %v59
    %v144 = vunpack.c.h.b16 %v59
    %v145 = vunpack.c.l.b16 %v60
    %v146 = vunpack.c.h.b16 %v60
    %v147 = vunpack.c.l.b16 %v61
    %v148 = vunpack.c.h.b16 %v61
    %v149 = vunpack.c.l.b16 %v62
    %v150 = vunpack.c.h.b16 %v62
    %v151 = vunpack.c.l.b16 %v63
    %v152 = vunpack.c.h.b16 %v63
    %v153 = vunpack.c.l.b16 %v64
    %v154 = vunpack.c.h.b16 %v64
    %v155 = vunpack.c.l.b16 %v65
    %v156 = vunpack.c.h.b16 %v65
    %v157 = vunpack.c.l.b16 %v66
    %v158 = vunpack.c.h.b16 %v66
    %v159 = vunpack.c.l.b16 %v67
    %v160 = vunpack.c.h.b16 %v67
    %v161 = vunpack.c.l.b16 %v68
    %v162 = vunpack.c.h.b16 %v68
    %v163 = vunpack.c.l.b16 %v69
    %v164 = vunpack.c.h.b16 %v69
    %v165 = vunpack.c.l.b16 %v70
    %v166 = vunpack.c.h.b16 %v70
    %v167 = vpack.c.b16 %v105, %v103
    %v168 = vpack.c.b16 %v106, %v104
    %v169 = vpack.c.b16 %v109, %v107
    %v170 = vpack.c.b16 %v110, %v108
    %v171 = vpack.c.b16 %v113, %v111
    %v172 = vpack.c.b16 %v114, %v112
    %v173 = vpack.c.b16 %v117, %v115
    %v174 = vpack.c.b16 %v118, %v116
    %v175 = vpack.c.b16 %v121, %v119
    %v176 = vpack.c.b16 %v122, %v120
    %v177 = vpack.c.b16 %v125, %v123
    %v178 = vpack.c.b16 %v126, %v124
    %v179 = vpack.c.b16 %v129, %v127
    %v180 = vpack.c.b16 %v130, %v128
    %v181 = vpack.c.b16 %v133, %v131
    %v182 = vpack.c.b16 %v134, %v132
    %v183 = vpack.c.b16 %v137, %v135
    %v184 = vpack.c.b16 %v138, %v136
    %v185 = vpack.c.b16 %v141, %v139
    %v186 = vpack.c.b16 %v142, %v140
    %v187 = vpack.c.b16 %v145, %v143
    %v188 = vpack.c.b16 %v146, %v144
    %v189 = vpack.c.b16 %v149, %v147
    %v190 = vpack.c.b16 %v150, %v148
    %v191 = vpack.c.b16 %v153, %v151
    %v192 = vpack.c.b16 %v154, %v152
    %v193 = vpack.c.b16 %v157, %v155
    %v194 = vpack.c.b16 %v158, %v156
    %v195 = vpack.c.b16 %v161, %v159
    %v196 = vpack.c.b16 %v162, %v160
    %v197 = vpack.c.b16 %v165, %v163
    %v198 = vpack.c.b16 %v166, %v164
    %231 = vmatprep.subr.bf16.mxu0 %v168
    %232 = vmatpush1.bf16.msra.mxu0 %v167
    %233 = vmatprep.subr.bf16.mxu0 %v170
    %234 = vmatpush1.bf16.msra.mxu0 %v169
    %235 = vmatprep.subr.bf16.mxu0 %v172
    %236 = vmatpush1.bf16.msra.mxu0 %v171
    %237 = vmatprep.subr.bf16.mxu0 %v174
    %238 = vmatpush1.bf16.msra.mxu0 %v173
    %239 = vmatprep.subr.bf16.mxu0 %v176
    %240 = vmatpush1.bf16.msra.mxu0 %v175
    %241 = vmatprep.subr.bf16.mxu0 %v178
    %242 = vmatpush1.bf16.msra.mxu0 %v177
    %243 = vmatprep.subr.bf16.mxu0 %v180
    %244 = vmatpush1.bf16.msra.mxu0 %v179
    %245 = vmatprep.subr.bf16.mxu0 %v182
    %246 = vmatpush1.bf16.msra.mxu0 %v181
    %247 = vmatprep.subr.bf16.mxu0 %v184
    %248 = vmatpush1.bf16.msra.mxu0 %v183
    %249 = vmatprep.subr.bf16.mxu0 %v186
    %250 = vmatpush1.bf16.msra.mxu0 %v185
    %251 = vmatprep.subr.bf16.mxu0 %v188
    %252 = vmatpush1.bf16.msra.mxu0 %v187
    %253 = vmatprep.subr.bf16.mxu0 %v190
    %254 = vmatpush1.bf16.msra.mxu0 %v189
    %255 = vmatprep.subr.bf16.mxu0 %v192
    %256 = vmatpush1.bf16.msra.mxu0 %v191
    %257 = vmatprep.subr.bf16.mxu0 %v194
    %258 = vmatpush1.bf16.msra.mxu0 %v193
    %259 = vmatprep.subr.bf16.mxu0 %v196
    %260 = vmatpush1.bf16.msra.mxu0 %v195
    %261 = vmatprep.subr.bf16.mxu0 %v198
    %262 = vmatpush1.bf16.msra.mxu0 %v197
    %263 = vmatprep.mubr.bf16.mxu0 %v38
    %264 = vmatmul.mubr.bf16.gmra.mrb[0].mxu0 %v37
    %v265 = vpop.f32.mrb[0].mxu0
    %v266 = vadd.f32 0.0, %v265
    %v267 = vpop.f32.mrb[0].mxu0
    %v268 = vadd.f32 0.0, %v267
    %v269 = vpop.f32.mrb[0].mxu0
    %v270 = vpop.f32.mrb[0].mxu0
    %271 = vdwg.mxu0
    %s272 = scalar_lea.vmem %s0, 16
    %v273 = vld [vmem:[%s272] sm:$0xff]
    %v274 = vld [vmem:[%s272 + $0x8] sm:$0xff]
    %v275 = vadd.f32 %v273, %v266
    %v276 = vadd.f32 %v274, %v268
    %v277 = vtanh.pop %v275
    %v278 = vtanh.pop %v276
    %v279 = vpack.c.bf16 %v277, %v277
    %v280 = vpack.c.bf16 %v278, %v278
    %281 = vmatprep.subr.bf16.mxu0 %v168
    %282 = vmatpush1.bf16.msra.mxu0 %v167
    %283 = vmatprep.subr.bf16.mxu0 %v170
    %284 = vmatpush1.bf16.msra.mxu0 %v169
    %285 = vmatprep.subr.bf16.mxu0 %v172
    %286 = vmatpush1.bf16.msra.mxu0 %v171
    %287 = vmatprep.subr.bf16.mxu0 %v174
    %288 = vmatpush1.bf16.msra.mxu0 %v173
    %289 = vmatprep.subr.bf16.mxu0 %v176
    %290 = vmatpush1.bf16.msra.mxu0 %v175
    %291 = vmatprep.subr.bf16.mxu0 %v178
    %292 = vmatpush1.bf16.msra.mxu0 %v177
    %293 = vmatprep.subr.bf16.mxu0 %v180
    %294 = vmatpush1.bf16.msra.mxu0 %v179
    %295 = vmatprep.subr.bf16.mxu0 %v182
    %296 = vmatpush1.bf16.msra.mxu0 %v181
    %297 = vmatprep.subr.bf16.mxu0 %v184
    %298 = vmatpush1.bf16.msra.mxu0 %v183
    %299 = vmatprep.subr.bf16.mxu0 %v186
    %300 = vmatpush1.bf16.msra.mxu0 %v185
    %301 = vmatprep.subr.bf16.mxu0 %v188
    %302 = vmatpush1.bf16.msra.mxu0 %v187
    %303 = vmatprep.subr.bf16.mxu0 %v190
    %304 = vmatpush1.bf16.msra.mxu0 %v189
    %305 = vmatprep.subr.bf16.mxu0 %v192
    %306 = vmatpush1.bf16.msra.mxu0 %v191
    %307 = vmatprep.subr.bf16.mxu0 %v194
    %308 = vmatpush1.bf16.msra.mxu0 %v193
    %309 = vmatprep.subr.bf16.mxu0 %v196
    %310 = vmatpush1.bf16.msra.mxu0 %v195
    %311 = vmatprep.subr.bf16.mxu0 %v198
    %312 = vmatpush1.bf16.msra.mxu0 %v197
    %313 = vmatprep.mubr.bf16.mxu0 %v280
    %314 = vmatmul.mubr.bf16.gmra.mrb[0].mxu0 %v279
    %v315 = vpop.f32.mrb[0].mxu0
    %v316 = vadd.f32 0.0, %v315
    %v317 = vpop.f32.mrb[0].mxu0
    %v318 = vadd.f32 0.0, %v317
    %v319 = vpop.f32.mrb[0].mxu0
    %v320 = vpop.f32.mrb[0].mxu0
    %321 = vdwg.mxu0
    %s322 = scalar_lea.vmem %s0, 32
    %v323 = vld [vmem:[%s322] sm:$0xff]
    %v324 = vld [vmem:[%s322 + $0x8] sm:$0xff]
    %v325 = vadd.f32 %v323, %v316
    %v326 = vadd.f32 %v324, %v318
    %v327 = vtanh.pop %v325
    %v328 = vtanh.pop %v326
    %v329 = vpack.c.bf16 %v327, %v327
    %v330 = vpack.c.bf16 %v328, %v328
    %331 = vmatprep.subr.bf16.mxu0 %v168
    %332 = vmatpush1.bf16.msra.mxu0 %v167
    %333 = vmatprep.subr.bf16.mxu0 %v170
    %334 = vmatpush1.bf16.msra.mxu0 %v169
    %335 = vmatprep.subr.bf16.mxu0 %v172
    %336 = vmatpush1.bf16.msra.mxu0 %v171
    %337 = vmatprep.subr.bf16.mxu0 %v174
    %338 = vmatpush1.bf16.msra.mxu0 %v173
    %339 = vmatprep.subr.bf16.mxu0 %v176
    %340 = vmatpush1.bf16.msra.mxu0 %v175
    %341 = vmatprep.subr.bf16.mxu0 %v178
    %342 = vmatpush1.bf16.msra.mxu0 %v177
    %343 = vmatprep.subr.bf16.mxu0 %v180
    %344 = vmatpush1.bf16.msra.mxu0 %v179
    %345 = vmatprep.subr.bf16.mxu0 %v182
    %346 = vmatpush1.bf16.msra.mxu0 %v181
    %347 = vmatprep.subr.bf16.mxu0 %v184
    %348 = vmatpush1.bf16.msra.mxu0 %v183
    %349 = vmatprep.subr.bf16.mxu0 %v186
    %350 = vmatpush1.bf16.msra.mxu0 %v185
    %351 = vmatprep.subr.bf16.mxu0 %v188
    %352 = vmatpush1.bf16.msra.mxu0 %v187
    %353 = vmatprep.subr.bf16.mxu0 %v190
    %354 = vmatpush1.bf16.msra.mxu0 %v189
    %355 = vmatprep.subr.bf16.mxu0 %v192
    %356 = vmatpush1.bf16.msra.mxu0 %v191
    %357 = vmatprep.subr.bf16.mxu0 %v194
    %358 = vmatpush1.bf16.msra.mxu0 %v193
    %359 = vmatprep.subr.bf16.mxu0 %v196
    %360 = vmatpush1.bf16.msra.mxu0 %v195
    %361 = vmatprep.subr.bf16.mxu0 %v198
    %362 = vmatpush1.bf16.msra.mxu0 %v197
    %363 = vmatprep.mubr.bf16.mxu0 %v330
    %364 = vmatmul.mubr.bf16.gmra.mrb[0].mxu0 %v329
    %v365 = vpop.f32.mrb[0].mxu0
    %v366 = vadd.f32 0.0, %v365
    %v367 = vpop.f32.mrb[0].mxu0
    %v368 = vadd.f32 0.0, %v367
    %v369 = vpop.f32.mrb[0].mxu0
    %v370 = vpop.f32.mrb[0].mxu0
    %371 = vdwg.mxu0
    %s372 = scalar_lea.vmem %s0, 48
    %v373 = vld [vmem:[%s372] sm:$0xff]
    %v374 = vld [vmem:[%s372 + $0x8] sm:$0xff]
    %v375 = vadd.f32 %v373, %v366
    %v376 = vadd.f32 %v374, %v368
    %v377 = vtanh.pop %v375
    %v378 = vtanh.pop %v376
    %v379 = vpack.c.bf16 %v377, %v377
    %v380 = vpack.c.bf16 %v378, %v378
    %381 = vmatprep.subr.bf16.mxu0 %v168
    %382 = vmatpush1.bf16.msra.mxu0 %v167
    %383 = vmatprep.subr.bf16.mxu0 %v170
    %384 = vmatpush1.bf16.msra.mxu0 %v169
    %385 = vmatprep.subr.bf16.mxu0 %v172
    %386 = vmatpush1.bf16.msra.mxu0 %v171
    %387 = vmatprep.subr.bf16.mxu0 %v174
    %388 = vmatpush1.bf16.msra.mxu0 %v173
    %389 = vmatprep.subr.bf16.mxu0 %v176
    %390 = vmatpush1.bf16.msra.mxu0 %v175
    %391 = vmatprep.subr.bf16.mxu0 %v178
    %392 = vmatpush1.bf16.msra.mxu0 %v177
    %393 = vmatprep.subr.bf16.mxu0 %v180
    %394 = vmatpush1.bf16.msra.mxu0 %v179
    %395 = vmatprep.subr.bf16.mxu0 %v182
    %396 = vmatpush1.bf16.msra.mxu0 %v181
    %397 = vmatprep.subr.bf16.mxu0 %v184
    %398 = vmatpush1.bf16.msra.mxu0 %v183
    %399 = vmatprep.subr.bf16.mxu0 %v186
    %400 = vmatpush1.bf16.msra.mxu0 %v185
    %401 = vmatprep.subr.bf16.mxu0 %v188
    %402 = vmatpush1.bf16.msra.mxu0 %v187
    %403 = vmatprep.subr.bf16.mxu0 %v190
    %404 = vmatpush1.bf16.msra.mxu0 %v189
    %405 = vmatprep.subr.bf16.mxu0 %v192
    %406 = vmatpush1.bf16.msra.mxu0 %v191
    %407 = vmatprep.subr.bf16.mxu0 %v194
    %408 = vmatpush1.bf16.msra.mxu0 %v193
    %409 = vmatprep.subr.bf16.mxu0 %v196
    %410 = vmatpush1.bf16.msra.mxu0 %v195
    %411 = vmatprep.subr.bf16.mxu0 %v198
    %412 = vmatpush1.bf16.msra.mxu0 %v197
    %413 = vmatprep.mubr.bf16.mxu0 %v380
    %414 = vmatmul.mubr.bf16.gmra.mrb[0].mxu0 %v379
    %v415 = vpop.f32.mrb[0].mxu0
    %v416 = vadd.f32 0.0, %v415
    %v417 = vpop.f32.mrb[0].mxu0
    %v418 = vadd.f32 0.0, %v417
    %v419 = vpop.f32.mrb[0].mxu0
    %v420 = vpop.f32.mrb[0].mxu0
    %421 = vdwg.mxu0
    %s422 = scalar_lea.vmem %s0, 64
    %v423 = vld [vmem:[%s422] sm:$0xff]
    %v424 = vld [vmem:[%s422 + $0x8] sm:$0xff]
    %v425 = vadd.f32 %v423, %v416
    %v426 = vadd.f32 %v424, %v418
    %v427 = vtanh.pop %v425
    %v428 = vtanh.pop %v426
    %v429 = vld [vmem:[%s2] sm:$0x3]
    %v431 = vlaneseq
    %v432 = vshrl.u32 %v431, 7
    %v433 = vsub.s32 0, %v432
    %v434 = vrot.slane %v429, %v433
    %v435 = vlaneseq
    %v436 = vshrl.u32 %v435, 7
    %v437 = vsub.s32 1, %v436
    %v438 = vrot.slane %v429, %v437
    %v441 = vmul.f32 %v427, %v434
    %v442 = vmul.f32 %v428, %v438
    %v443 = vadd.f32 %v441, %v442
    %444 = vadd.xlane.f32.xlu0 %v443
    %v445 = vpop.xlane.xlu0 %444
    %v446 = vld [vmem:[#allocation2] sm:$0x1]
    %v448 = vlaneseq
    %v449 = vshrl.u32 %v448, 7
    %v450 = vsub.s32 0, %v449
    %v451 = vrot.slane %v446, %v450
    %v453 = vadd.f32 %v445, %v451
    %vm454 = vcmask 7168
    %455 = vst.msk [vmem:[%s4] sm:$0xff] %vm454, %v453
    // Predicated region
    $region22: #{myrnn_forward.1} parent=1 // pred_check
      _
    $region23: #{myrnn_forward.1} parent=1 // pred_check_branch
      %457 = sbr.rel (0) target = $region25
    $region24: #{myrnn_forward.1} parent=1 // pred_region
      _
    $region25: #{myrnn_forward.1} parent=1 // pred_fallthru
      _
    // Predicated region
    $region26: #{myrnn_forward.1} parent=1 // pred_check
      _
    $region27: #{myrnn_forward.1} parent=1 // pred_check_branch
      %459 = sbr.rel (0) target = $region29
    $region28: #{myrnn_forward.1} parent=1 // pred_region
      _
    $region29: #{myrnn_forward.1} parent=1 // pred_fallthru
      _
    %460 = vsyncpa [#allocation4], 1

</llo_original>
